<compile_context>
chip_gen: v6e
topology: v6e:2x2x1
jax: 0.10.0
libtpu: 0.0.40
codegen_flags: <defaults>
</compile_context>

<pallas_src>
import functools

import jax
import jax.numpy as jnp
from jax.experimental import pallas as pl
from jax.experimental.pallas import tpu as pltpu


def simple_attention_kernel(psi_ref, w1_ref, b1_ref, w2_ref, b2_ref,
                            w3_ref, b3_ref, o_ref):
    """One batch tile: o = psi * softmax(MLP(psi)).

    The pass-through columns of `params` are never read or written here —
    they persist in the input/output-aliased HBM buffer.
    """
    psi = psi_ref[...]                                   # (TB, psi_dim)

    # 3-layer MLP on the MXU with f32 accumulation; bias/tanh on VPU/EUP.
    # Activations are kept in the weight dtype so bf16 weights take the
    # native bf16 MXU path (no-op casts for the f32 weights used below).
    h = jnp.tanh(jnp.dot(psi, w1_ref[...],
                         preferred_element_type=jnp.float32) + b1_ref[...])
    h = h.astype(w2_ref.dtype)
    h = jnp.tanh(jnp.dot(h, w2_ref[...],
                         preferred_element_type=jnp.float32) + b2_ref[...])
    h = h.astype(w3_ref.dtype)
    logits = jnp.dot(h, w3_ref[...],
                     preferred_element_type=jnp.float32) + b3_ref[...]

    # Numerically-stable softmax over the feature axis (PyTorch dim=1).
    # Divide -> EUP approximate reciprocal (frees the VPU slot).
    m = jnp.max(logits, axis=-1, keepdims=True)
    e = jnp.exp(logits - m)
    attn = e * pl.reciprocal(jnp.sum(e, axis=-1, keepdims=True), approx=True)

    # 128-lane aligned, unmasked full-lane store of the psi block only.
    o_ref[...] = (psi.astype(jnp.float32) * attn).astype(o_ref.dtype)


def simple_attention(params, w1, b1, w2, b2, w3, b3, *, psi_dim, tb=512):
    """params: (B, D_total); weights stored transposed vs PyTorch: (in, out).

    The output aliases `params` (donate it): only the psi columns are DMA'd
    and rewritten; columns [psi_dim:] pass through untouched in HBM.
    """
    B, D_total = params.shape
    hidden = w1.shape[1]
    tb = min(tb, B)                      # toy batches -> one grid step
    return pl.pallas_call(
        simple_attention_kernel,
        out_shape=jax.ShapeDtypeStruct((B, D_total), params.dtype),
        grid_spec=pl.GridSpec(
            grid=(pl.cdiv(B, tb),),
            in_specs=[
                # Only the psi columns of params are ever fetched.
                pl.BlockSpec((tb, psi_dim), lambda i: (i, 0)),
                pl.BlockSpec((psi_dim, hidden), lambda i: (0, 0)),   # w1 (resident)
                pl.BlockSpec((1, hidden), lambda i: (0, 0)),         # b1
                pl.BlockSpec((hidden, hidden), lambda i: (0, 0)),    # w2
                pl.BlockSpec((1, hidden), lambda i: (0, 0)),         # b2
                pl.BlockSpec((hidden, psi_dim), lambda i: (0, 0)),   # w3
                pl.BlockSpec((1, psi_dim), lambda i: (0, 0)),        # b3
            ],
            # Only the psi columns of the output are ever written back.
            out_specs=pl.BlockSpec((tb, psi_dim), lambda i: (i, 0)),
        ),
        # Output buffer == params buffer: pass-through columns come for free.
        input_output_aliases={0: 0},
        compiler_params=pltpu.CompilerParams(
            dimension_semantics=("parallel",),   # megacore-shard batch tiles (v7x)
        ),
    )(params, w1, b1, w2, b2, w3, b3)


def reference(params, w1, b1, w2, b2, w3, b3, psi_dim):
    hp = jax.lax.Precision.HIGHEST
    psi = params[:, :psi_dim]
    h = jnp.tanh(jnp.dot(psi, w1, precision=hp) + b1)
    h = jnp.tanh(jnp.dot(h, w2, precision=hp) + b2)
    logits = jnp.dot(h, w3, precision=hp) + b3
    attn = jax.nn.softmax(logits, axis=1)
    return jnp.concatenate([psi * attn, params[:, psi_dim:]], axis=1)


if __name__ == "__main__":
    # Lane-dense shapes: psi_dim = hidden_dim = 128, 128 extra pass-through
    # features (D_total = 256), batch 256 -> a single 256-row grid step.
    psi_dim, hidden_dim, extra_dim = 128, 128, 128
    B = 256
    D_total = psi_dim + extra_dim

    key = jax.random.PRNGKey(0)
    k_p, k_w1, k_b1, k_w2, k_b2, k_w3, k_b3 = jax.random.split(key, 7)

    def uinit(k, shape, fan_in):
        bound = 1.0 / (fan_in ** 0.5)        # PyTorch nn.Linear default init bound
        return jax.random.uniform(k, shape, minval=-bound, maxval=bound,
                                  dtype=jnp.float32)

    # Weights stored transposed relative to PyTorch: (in_features, out_features).
    w1 = uinit(k_w1, (psi_dim, hidden_dim), psi_dim)
    b1 = uinit(k_b1, (1, hidden_dim), psi_dim)
    w2 = uinit(k_w2, (hidden_dim, hidden_dim), hidden_dim)
    b2 = uinit(k_b2, (1, hidden_dim), hidden_dim)
    w3 = uinit(k_w3, (hidden_dim, psi_dim), hidden_dim)
    b3 = uinit(k_b3, (1, psi_dim), hidden_dim)

    params = jax.random.normal(k_p, (B, D_total), dtype=jnp.float32)

    # Reference computed BEFORE the kernel call: params is donated to the
    # kernel (input/output aliasing) and must not be reused afterwards.
    ref = reference(params, w1, b1, w2, b2, w3, b3, psi_dim)

    fwd = jax.jit(functools.partial(simple_attention, psi_dim=psi_dim, tb=512),
                  donate_argnums=(0,))
    out = jax.block_until_ready(fwd(params, w1, b1, w2, b2, w3, b3))

    assert out.shape == (B, D_total)
    # Tolerance loosened from 1e-4 to cover the EUP approximate reciprocal
    # (~2^-12 relative error) in the softmax denominator.
    assert jnp.allclose(out, ref, atol=2e-3, rtol=2e-3), \
        float(jnp.max(jnp.abs(out - ref)))

    print("KERNEL_OK")
</pallas_src>

<mosaic_0001>
module attributes {stable_mosaic.version = 11 : i64} {
  func.func @simple_attention_kernel(%arg0: i32, %arg1: memref<256x128xf32, #tpu.memory_space<vmem>>, %arg2: memref<128x128xf32, #tpu.memory_space<vmem>>, %arg3: memref<1x128xf32, #tpu.memory_space<vmem>>, %arg4: memref<128x128xf32, #tpu.memory_space<vmem>>, %arg5: memref<1x128xf32, #tpu.memory_space<vmem>>, %arg6: memref<128x128xf32, #tpu.memory_space<vmem>>, %arg7: memref<1x128xf32, #tpu.memory_space<vmem>>, %arg8: memref<256x128xf32, #tpu.memory_space<vmem>>) attributes {dimension_semantics = [#tpu.dimension_semantics<parallel>], iteration_bounds = array<i64: 1>, scalar_prefetch = 0 : i64, scratch_operands = 0 : i64, tpu.core_type = #tpu.core_type<tc>, window_params = [{transform_indices = @transform_0, window_bounds = array<i64: 256, 128>}, {pipeline_mode = #tpu.pipeline_mode<synchronous>, transform_indices = @transform_1, window_bounds = array<i64: 128, 128>}, {pipeline_mode = #tpu.pipeline_mode<synchronous>, transform_indices = @transform_2, window_bounds = array<i64: 1, 128>}, {pipeline_mode = #tpu.pipeline_mode<synchronous>, transform_indices = @transform_3, window_bounds = array<i64: 128, 128>}, {pipeline_mode = #tpu.pipeline_mode<synchronous>, transform_indices = @transform_4, window_bounds = array<i64: 1, 128>}, {pipeline_mode = #tpu.pipeline_mode<synchronous>, transform_indices = @transform_5, window_bounds = array<i64: 128, 128>}, {pipeline_mode = #tpu.pipeline_mode<synchronous>, transform_indices = @transform_6, window_bounds = array<i64: 1, 128>}, {transform_indices = @transform_7, window_bounds = array<i64: 256, 128>}]} {
    %c0 = arith.constant 0 : index
    %c0_0 = arith.constant 0 : index
    %0 = vector.load %arg1[%c0, %c0_0] : memref<256x128xf32, #tpu.memory_space<vmem>>, vector<256x128xf32>
    %c0_1 = arith.constant 0 : index
    %c0_2 = arith.constant 0 : index
    %1 = vector.load %arg2[%c0_1, %c0_2] : memref<128x128xf32, #tpu.memory_space<vmem>>, vector<128x128xf32>
    %cst = arith.constant dense<0.000000e+00> : vector<256x128xf32>
    %2 = tpu.matmul %0, %1, %cst {dimension_numbers = #tpu.dot_dimension_numbers<[1], [0], [0], [1], [0, 0, 1, 1], [], []>} : vector<256x128xf32>, vector<128x128xf32>, vector<256x128xf32> -> vector<256x128xf32>
    %c0_3 = arith.constant 0 : index
    %c0_4 = arith.constant 0 : index
    %3 = vector.load %arg3[%c0_3, %c0_4] : memref<1x128xf32, #tpu.memory_space<vmem>>, vector<1x128xf32>
    %4 = vector.broadcast %3 : vector<1x128xf32> to vector<256x128xf32>
    %5 = arith.addf %2, %4 : vector<256x128xf32>
    %6 = math.tanh %5 : vector<256x128xf32>
    %c0_5 = arith.constant 0 : index
    %c0_6 = arith.constant 0 : index
    %7 = vector.load %arg4[%c0_5, %c0_6] : memref<128x128xf32, #tpu.memory_space<vmem>>, vector<128x128xf32>
    %cst_7 = arith.constant dense<0.000000e+00> : vector<256x128xf32>
    %8 = tpu.matmul %6, %7, %cst_7 {dimension_numbers = #tpu.dot_dimension_numbers<[1], [0], [0], [1], [0, 0, 1, 1], [], []>} : vector<256x128xf32>, vector<128x128xf32>, vector<256x128xf32> -> vector<256x128xf32>
    %c0_8 = arith.constant 0 : index
    %c0_9 = arith.constant 0 : index
    %9 = vector.load %arg5[%c0_8, %c0_9] : memref<1x128xf32, #tpu.memory_space<vmem>>, vector<1x128xf32>
    %10 = vector.broadcast %9 : vector<1x128xf32> to vector<256x128xf32>
    %11 = arith.addf %8, %10 : vector<256x128xf32>
    %12 = math.tanh %11 : vector<256x128xf32>
    %c0_10 = arith.constant 0 : index
    %c0_11 = arith.constant 0 : index
    %13 = vector.load %arg6[%c0_10, %c0_11] : memref<128x128xf32, #tpu.memory_space<vmem>>, vector<128x128xf32>
    %cst_12 = arith.constant dense<0.000000e+00> : vector<256x128xf32>
    %14 = tpu.matmul %12, %13, %cst_12 {dimension_numbers = #tpu.dot_dimension_numbers<[1], [0], [0], [1], [0, 0, 1, 1], [], []>} : vector<256x128xf32>, vector<128x128xf32>, vector<256x128xf32> -> vector<256x128xf32>
    %c0_13 = arith.constant 0 : index
    %c0_14 = arith.constant 0 : index
    %15 = vector.load %arg7[%c0_13, %c0_14] : memref<1x128xf32, #tpu.memory_space<vmem>>, vector<1x128xf32>
    %16 = vector.broadcast %15 : vector<1x128xf32> to vector<256x128xf32>
    %17 = arith.addf %14, %16 : vector<256x128xf32>
    %cst_15 = arith.constant dense<0xFF800000> : vector<256xf32>
    %18 = vector.multi_reduction <maximumf>, %17, %cst_15 [1] : vector<256x128xf32> to vector<256xf32>
    %19 = vector.shape_cast %18 : vector<256xf32> to vector<256x1xf32>
    %20 = vector.broadcast %19 : vector<256x1xf32> to vector<256x128xf32>
    %21 = arith.subf %17, %20 : vector<256x128xf32>
    %22 = math.exp %21 : vector<256x128xf32>
    %cst_16 = arith.constant dense<0.000000e+00> : vector<256xf32>
    %23 = vector.multi_reduction <add>, %22, %cst_16 [1] : vector<256x128xf32> to vector<256xf32>
    %24 = vector.shape_cast %23 : vector<256xf32> to vector<256x1xf32>
    %25 = tpu.reciprocal %24 {approx = true} : vector<256x1xf32> -> vector<256x1xf32>
    %26 = vector.broadcast %25 : vector<256x1xf32> to vector<256x128xf32>
    %27 = arith.mulf %22, %26 : vector<256x128xf32>
    %28 = arith.mulf %0, %27 : vector<256x128xf32>
    %c0_17 = arith.constant 0 : index
    %c0_18 = arith.constant 0 : index
    %29 = vector.load %arg8[%c0_17, %c0_18] : memref<256x128xf32, #tpu.memory_space<vmem>>, vector<256x128xf32>
    tpu.vector_store %arg8[%c0_17, %c0_18], %28 {strides = array<i32>} : memref<256x128xf32, #tpu.memory_space<vmem>>, vector<256x128xf32>,
    return
  }
  func.func @transform_0(%arg0: i32) -> (i32, i32) {
    %c0_i32 = arith.constant 0 : i32
    %c0_i32_0 = arith.constant 0 : i32
    return %arg0, %c0_i32 : i32, i32
  }
  func.func @transform_1(%arg0: i32) -> (i32, i32) {
    %c0_i32 = arith.constant 0 : i32
    %c0_i32_0 = arith.constant 0 : i32
    %c0_i32_1 = arith.constant 0 : i32
    return %c0_i32, %c0_i32_0 : i32, i32
  }
  func.func @transform_2(%arg0: i32) -> (i32, i32) {
    %c0_i32 = arith.constant 0 : i32
    %c0_i32_0 = arith.constant 0 : i32
    %c0_i32_1 = arith.constant 0 : i32
    return %c0_i32, %c0_i32_0 : i32, i32
  }
  func.func @transform_3(%arg0: i32) -> (i32, i32) {
    %c0_i32 = arith.constant 0 : i32
    %c0_i32_0 = arith.constant 0 : i32
    %c0_i32_1 = arith.constant 0 : i32
    return %c0_i32, %c0_i32_0 : i32, i32
  }
  func.func @transform_4(%arg0: i32) -> (i32, i32) {
    %c0_i32 = arith.constant 0 : i32
    %c0_i32_0 = arith.constant 0 : i32
    %c0_i32_1 = arith.constant 0 : i32
    return %c0_i32, %c0_i32_0 : i32, i32
  }
  func.func @transform_5(%arg0: i32) -> (i32, i32) {
    %c0_i32 = arith.constant 0 : i32
    %c0_i32_0 = arith.constant 0 : i32
    %c0_i32_1 = arith.constant 0 : i32
    return %c0_i32, %c0_i32_0 : i32, i32
  }
  func.func @transform_6(%arg0: i32) -> (i32, i32) {
    %c0_i32 = arith.constant 0 : i32
    %c0_i32_0 = arith.constant 0 : i32
    %c0_i32_1 = arith.constant 0 : i32
    return %c0_i32, %c0_i32_0 : i32, i32
  }
  func.func @transform_7(%arg0: i32) -> (i32, i32) {
    %c0_i32 = arith.constant 0 : i32
    %c0_i32_0 = arith.constant 0 : i32
    return %arg0, %c0_i32 : i32, i32
  }
}

</mosaic_0001>

<llo_original>
// kernel: simple_attention.1
$region0: #{simple_attention.1}
  #allocation0 [shape = 'u32[]', space=smem, size = 0x4, offset = 0x4, fixed_abs, tag = 'smem constant byte address 0x4 - core index']
  #allocation1 [shape = 'u32[144,128]{1,0:T(1,128)}', space=vmem, size = 0x12000, scoped, tag = 'internal scratch']
  %s0 = inlined_call_operand.hbm [shape: f32[256,256], index: 0, kind: input, shape index: {}, may-alias: {0,7}]
  %s1 = inlined_call_operand.hbm [shape: f32[128,128], index: 1, kind: input, shape index: {}]
  %s2 = inlined_call_operand.vmem [shape: f32[1,128], index: 2, kind: input, shape index: {}]
  %s3 = inlined_call_operand.hbm [shape: f32[128,128], index: 3, kind: input, shape index: {}]
  %s4 = inlined_call_operand.vmem [shape: f32[1,128], index: 4, kind: input, shape index: {}]
  %s5 = inlined_call_operand.hbm [shape: f32[128,128], index: 5, kind: input, shape index: {}]
  %s6 = inlined_call_operand.vmem [shape: f32[1,128], index: 6, kind: input, shape index: {}]
  %s7 = inlined_call_operand.hbm [shape: f32[256,256], index: 7, kind: output, shape index: {}, may-alias: {0,7}]
  %s8 = sld [smem:[#allocation0]]
  $region54: #{simple_attention.1} parent=0
    _
  %s10 = ssub.s32 1, %s8
  %s11 = scalar_select 0, %s10, %s8
  $region1: #{simple_attention.1} parent=0
    #allocation2 [shape = 'u8[131072]{0}', space=vmem, size = 0x20000, scoped, tag = 'input window, operand 0, single buffered']
    #allocation3 [shape = 's32[1]{0}', space=sflag, size = 0x4, scoped, tag = 'scoped memory for simple_attention.1']
    #allocation4 [shape = 's32[1]{0}', space=sflag, size = 0x4, scoped, tag = 'scoped memory for simple_attention.1']
    #allocation5 [shape = 'u8[65536]{0}', space=vmem, size = 0x10000, scoped, tag = 'input window, operand 1, single buffered']
    #allocation6 [shape = 's32[1]{0}', space=sflag, size = 0x4, scoped, tag = 'scoped memory for simple_attention.1']
    #allocation7 [shape = 'u8[65536]{0}', space=vmem, size = 0x10000, scoped, tag = 'input window, operand 3, single buffered']
    #allocation8 [shape = 'u8[65536]{0}', space=vmem, size = 0x10000, scoped, tag = 'input window, operand 5, single buffered']
    #allocation9 [shape = 's32[1]{0}', space=sflag, size = 0x4, scoped, tag = 'scoped memory for simple_attention.1']
    #allocation10 [shape = 'u8[131072]{0}', space=vmem, size = 0x20000, scoped, tag = 'output window, operand 0, single buffered']
    %12 = vsyncpa [#allocation3], 0
    %13 = vsyncpa [#allocation6], 0
    %14 = vsyncpa [#allocation9], 0
    %15 = vsyncpa [#allocation4], 0
    // Predicated region
    $region2: #{simple_attention.1} parent=1 // pred_check
      _
    $region3: #{simple_attention.1} parent=1 // pred_check_branch
      %17 = sbr.rel (0) target = $region5
    $region4: #{simple_attention.1} parent=1 // pred_region
      %s19 = ssub.s32 4096, 4096
      %20 = vsyncadd [#allocation3], %s19
      %s21 = sshll.u32 [#allocation2], 4
      %s22 = int_to_ptr.vmem [resolvable:$true] %s21
      %27 = dma.hbm_to_vmem [thread:$0]  %s0, 4096, %s22, [#allocation3], 256, 128, 8
    $region5: #{simple_attention.1} parent=1 // pred_fallthru
      _
    // Predicated region
    $region6: #{simple_attention.1} parent=1 // pred_check
      _
    $region7: #{simple_attention.1} parent=1 // pred_check_branch
      %29 = sbr.rel (0) target = $region9
    $region8: #{simple_attention.1} parent=1 // pred_region
      %s31 = ssub.s32 2048, 2048
      %32 = vsyncadd [#allocation6], %s31
      %s33 = sshll.u32 [#allocation5], 4
      %s34 = int_to_ptr.vmem [resolvable:$true] %s33
      %39 = dma.hbm_to_vmem [thread:$0]  %s1, 2048, %s34, [#allocation6], 128, 128, 8
    $region9: #{simple_attention.1} parent=1 // pred_fallthru
      _
    // Predicated region
    $region10: #{simple_attention.1} parent=1 // pred_check
      _
    $region11: #{simple_attention.1} parent=1 // pred_check_branch
      %41 = sbr.rel (0) target = $region13
    $region12: #{simple_attention.1} parent=1 // pred_region
      _
    $region13: #{simple_attention.1} parent=1 // pred_fallthru
      _
    // Predicated region
    $region14: #{simple_attention.1} parent=1 // pred_check
      _
    $region15: #{simple_attention.1} parent=1 // pred_check_branch
      %43 = sbr.rel (0) target = $region17
    $region16: #{simple_attention.1} parent=1 // pred_region
      %s45 = ssub.s32 2048, 2048
      %46 = vsyncadd [#allocation6], %s45
      %s47 = sshll.u32 [#allocation7], 4
      %s48 = int_to_ptr.vmem [resolvable:$true] %s47
      %53 = dma.hbm_to_vmem [thread:$0]  %s3, 2048, %s48, [#allocation6], 128, 128, 8
    $region17: #{simple_attention.1} parent=1 // pred_fallthru
      _
    // Predicated region
    $region18: #{simple_attention.1} parent=1 // pred_check
      _
    $region19: #{simple_attention.1} parent=1 // pred_check_branch
      %55 = sbr.rel (0) target = $region21
    $region20: #{simple_attention.1} parent=1 // pred_region
      _
    $region21: #{simple_attention.1} parent=1 // pred_fallthru
      _
    // Predicated region
    $region22: #{simple_attention.1} parent=1 // pred_check
      _
    $region23: #{simple_attention.1} parent=1 // pred_check_branch
      %57 = sbr.rel (0) target = $region25
    $region24: #{simple_attention.1} parent=1 // pred_region
      %s59 = ssub.s32 2048, 2048
      %60 = vsyncadd [#allocation9], %s59
      %s61 = sshll.u32 [#allocation8], 4
      %s62 = int_to_ptr.vmem [resolvable:$true] %s61
      %67 = dma.hbm_to_vmem [thread:$0]  %s5, 2048, %s62, [#allocation9], 128, 128, 8
    $region25: #{simple_attention.1} parent=1 // pred_fallthru
      _
    // Predicated region
    $region26: #{simple_attention.1} parent=1 // pred_check
      _
    $region27: #{simple_attention.1} parent=1 // pred_check_branch
      %69 = sbr.rel (0) target = $region29
    $region28: #{simple_attention.1} parent=1 // pred_region
      _
    $region29: #{simple_attention.1} parent=1 // pred_fallthru
      _
    // Predicated region
    $region30: #{simple_attention.1} parent=1 // pred_check
      _
    $region31: #{simple_attention.1} parent=1 // pred_check_branch
      %71 = sbr.rel (0) target = $region33
    $region32: #{simple_attention.1} parent=1 // pred_region
      %72 = dma.done [#allocation3], 4096
    $region33: #{simple_attention.1} parent=1 // pred_fallthru
      _
    // Predicated region
    $region34: #{simple_attention.1} parent=1 // pred_check
      _
    $region35: #{simple_attention.1} parent=1 // pred_check_branch
      %74 = sbr.rel (0) target = $region37
    $region36: #{simple_attention.1} parent=1 // pred_region
      %75 = dma.done [#allocation6], 2048
    $region37: #{simple_attention.1} parent=1 // pred_fallthru
      _
    // Predicated region
    $region38: #{simple_attention.1} parent=1 // pred_check
      _
    $region39: #{simple_attention.1} parent=1 // pred_check_branch
      %77 = sbr.rel (0) target = $region41
    $region40: #{simple_attention.1} parent=1 // pred_region
      %78 = dma.done [#allocation6], 2048
    $region41: #{simple_attention.1} parent=1 // pred_fallthru
      _
    // Predicated region
    $region42: #{simple_attention.1} parent=1 // pred_check
      _
    $region43: #{simple_attention.1} parent=1 // pred_check_branch
      %80 = sbr.rel (0) target = $region45
    $region44: #{simple_attention.1} parent=1 // pred_region
      %81 = dma.done [#allocation9], 2048
    $region45: #{simple_attention.1} parent=1 // pred_fallthru
      _
    %v82 = vld [vmem:[#allocation2] sm:$0xff]
    %v83 = vld [vmem:[#allocation2 + $0x8] sm:$0xff]
    %v84 = vld [vmem:[#allocation2 + $0x10] sm:$0xff]
    %v85 = vld [vmem:[#allocation2 + $0x18] sm:$0xff]
    %v86 = vld [vmem:[#allocation2 + $0x20] sm:$0xff]
    %v87 = vld [vmem:[#allocation2 + $0x28] sm:$0xff]
    %v88 = vld [vmem:[#allocation2 + $0x30] sm:$0xff]
    %v89 = vld [vmem:[#allocation2 + $0x38] sm:$0xff]
    %v90 = vld [vmem:[#allocation2 + $0x40] sm:$0xff]
    %v91 = vld [vmem:[#allocation2 + $0x48] sm:$0xff]
    %v92 = vld [vmem:[#allocation2 + $0x50] sm:$0xff]
    %v93 = vld [vmem:[#allocation2 + $0x58] sm:$0xff]
    %v94 = vld [vmem:[#allocation2 + $0x60] sm:$0xff]
    %v95 = vld [vmem:[#allocation2 + $0x68] sm:$0xff]
    %v96 = vld [vmem:[#allocation2 + $0x70] sm:$0xff]
    %v97 = vld [vmem:[#allocation2 + $0x78] sm:$0xff]
    %v98 = vld [vmem:[#allocation2 + $0x80] sm:$0xff]
    %v99 = vld [vmem:[#allocation2 + $0x88] sm:$0xff]
    %v100 = vld [vmem:[#allocation2 + $0x90] sm:$0xff]
    %v101 = vld [vmem:[#allocation2 + $0x98] sm:$0xff]
    %v102 = vld [vmem:[#allocation2 + $0xa0] sm:$0xff]
    %v103 = vld [vmem:[#allocation2 + $0xa8] sm:$0xff]
    %v104 = vld [vmem:[#allocation2 + $0xb0] sm:$0xff]
    %v105 = vld [vmem:[#allocation2 + $0xb8] sm:$0xff]
    %v106 = vld [vmem:[#allocation2 + $0xc0] sm:$0xff]
    %v107 = vld [vmem:[#allocation2 + $0xc8] sm:$0xff]
    %v108 = vld [vmem:[#allocation2 + $0xd0] sm:$0xff]
    %v109 = vld [vmem:[#allocation2 + $0xd8] sm:$0xff]
    %v110 = vld [vmem:[#allocation2 + $0xe0] sm:$0xff]
    %v111 = vld [vmem:[#allocation2 + $0xe8] sm:$0xff]
    %v112 = vld [vmem:[#allocation2 + $0xf0] sm:$0xff]
    %v113 = vld [vmem:[#allocation2 + $0xf8] sm:$0xff]
    %v114 = vld [vmem:[#allocation5] sm:$0xff]
    %v115 = vld [vmem:[#allocation5 + $0x8] sm:$0xff]
    %v116 = vld [vmem:[#allocation5 + $0x10] sm:$0xff]
    %v117 = vld [vmem:[#allocation5 + $0x18] sm:$0xff]
    %v118 = vld [vmem:[#allocation5 + $0x20] sm:$0xff]
    %v119 = vld [vmem:[#allocation5 + $0x28] sm:$0xff]
    %v120 = vld [vmem:[#allocation5 + $0x30] sm:$0xff]
    %v121 = vld [vmem:[#allocation5 + $0x38] sm:$0xff]
    %v122 = vld [vmem:[#allocation5 + $0x40] sm:$0xff]
    %v123 = vld [vmem:[#allocation5 + $0x48] sm:$0xff]
    %v124 = vld [vmem:[#allocation5 + $0x50] sm:$0xff]
    %v125 = vld [vmem:[#allocation5 + $0x58] sm:$0xff]
    %v126 = vld [vmem:[#allocation5 + $0x60] sm:$0xff]
    %v127 = vld [vmem:[#allocation5 + $0x68] sm:$0xff]
    %v128 = vld [vmem:[#allocation5 + $0x70] sm:$0xff]
    %v129 = vld [vmem:[#allocation5 + $0x78] sm:$0xff]
    %v130 = vld [vmem:[%s2] sm:$0x1]
    %v132 = vlaneseq
    %v133 = vshrl.u32 %v132, 7
    %v134 = vsub.s32 0, %v133
    %v135 = vrot.slane %v130, %v134
    %137 = vmatprep.subr.mxu0 0.0
    %138 = vmatpush1.msra.mxu0 %v129
    %139 = vmatprep.subr.mxu0 0.0
    %140 = vmatpush1.msra.mxu0 %v128
    %141 = vmatprep.subr.mxu0 0.0
    %142 = vmatpush1.msra.mxu0 %v127
    %143 = vmatprep.subr.mxu0 0.0
    %144 = vmatpush1.msra.mxu0 %v126
    %145 = vmatprep.subr.mxu0 0.0
    %146 = vmatpush1.msra.mxu0 %v125
    %147 = vmatprep.subr.mxu0 0.0
    %148 = vmatpush1.msra.mxu0 %v124
    %149 = vmatprep.subr.mxu0 0.0
    %150 = vmatpush1.msra.mxu0 %v123
    %151 = vmatprep.subr.mxu0 0.0
    %152 = vmatpush1.msra.mxu0 %v122
    %153 = vmatprep.subr.mxu0 0.0
    %154 = vmatpush1.msra.mxu0 %v121
    %155 = vmatprep.subr.mxu0 0.0
    %156 = vmatpush1.msra.mxu0 %v120
    %157 = vmatprep.subr.mxu0 0.0
    %158 = vmatpush1.msra.mxu0 %v119
    %159 = vmatprep.subr.mxu0 0.0
    %160 = vmatpush1.msra.mxu0 %v118
    %161 = vmatprep.subr.mxu0 0.0
    %162 = vmatpush1.msra.mxu0 %v117
    %163 = vmatprep.subr.mxu0 0.0
    %164 = vmatpush1.msra.mxu0 %v116
    %165 = vmatprep.subr.mxu0 0.0
    %166 = vmatpush1.msra.mxu0 %v115
    %167 = vmatprep.subr.mxu0 0.0
    %168 = vmatpush1.msra.mxu0 %v114
    %169 = vmatprep.subr.mxu0 0.0
    %170 = vmatpush2.msra.mxu0 0.0
    %171 = vmatprep.subr.mxu0 0.0
    %172 = vmatpush2.msra.mxu0 0.0
    %173 = vmatprep.subr.mxu0 0.0
    %174 = vmatpush2.msra.mxu0 0.0
    %175 = vmatprep.subr.mxu0 0.0
    %176 = vmatpush2.msra.mxu0 0.0
    %177 = vmatprep.subr.mxu0 0.0
    %178 = vmatpush2.msra.mxu0 0.0
    %179 = vmatprep.subr.mxu0 0.0
    %180 = vmatpush2.msra.mxu0 0.0
    %181 = vmatprep.subr.mxu0 0.0
    %182 = vmatpush2.msra.mxu0 0.0
    %183 = vmatprep.subr.mxu0 0.0
    %184 = vmatpush2.msra.mxu0 0.0
    %185 = vmatprep.subr.mxu0 0.0
    %186 = vmatpush2.msra.mxu0 0.0
    %187 = vmatprep.subr.mxu0 0.0
    %188 = vmatpush2.msra.mxu0 0.0
    %189 = vmatprep.subr.mxu0 0.0
    %190 = vmatpush2.msra.mxu0 0.0
    %191 = vmatprep.subr.mxu0 0.0
    %192 = vmatpush2.msra.mxu0 0.0
    %193 = vmatprep.subr.mxu0 0.0
    %194 = vmatpush2.msra.mxu0 0.0
    %195 = vmatprep.subr.mxu0 0.0
    %196 = vmatpush2.msra.mxu0 0.0
    %197 = vmatprep.subr.mxu0 0.0
    %198 = vmatpush2.msra.mxu0 0.0
    %199 = vmatprep.subr.mxu0 0.0
    %200 = vmatpush2.msra.mxu0 0.0
    %201 = vmatprep.mubr.f32.mxu0 0.0
    %202 = vmatmul.mubr.f32.gmra.mxu0 %v82
    %v203 = vpop.f32.mrf.mxu0
    %v204 = vadd.f32 %v135, %v203
    %v205 = vpop.f32.mrf.mxu0
    %206 = vmatprep.mubr.f32.mxu0 0.0
    %207 = vmatmul.mubr.f32.gmra.mxu0 %v83
    %v208 = vpop.f32.mrf.mxu0
    %v209 = vadd.f32 %v135, %v208
    %v210 = vpop.f32.mrf.mxu0
    %211 = vmatprep.mubr.f32.mxu0 0.0
    %212 = vmatmul.mubr.f32.gmra.mxu0 %v84
    %v213 = vpop.f32.mrf.mxu0
    %v214 = vadd.f32 %v135, %v213
    %v215 = vpop.f32.mrf.mxu0
    %216 = vmatprep.mubr.f32.mxu0 0.0
    %217 = vmatmul.mubr.f32.gmra.mxu0 %v85
    %v218 = vpop.f32.mrf.mxu0
    %v219 = vadd.f32 %v135, %v218
    %v220 = vpop.f32.mrf.mxu0
    %221 = vmatprep.mubr.f32.mxu0 0.0
    %222 = vmatmul.mubr.f32.gmra.mxu0 %v86
    %v223 = vpop.f32.mrf.mxu0
    %v224 = vadd.f32 %v135, %v223
    %v225 = vpop.f32.mrf.mxu0
    %226 = vmatprep.mubr.f32.mxu0 0.0
    %227 = vmatmul.mubr.f32.gmra.mxu0 %v87
    %v228 = vpop.f32.mrf.mxu0
    %v229 = vadd.f32 %v135, %v228
    %v230 = vpop.f32.mrf.mxu0
    %231 = vmatprep.mubr.f32.mxu0 0.0
    %232 = vmatmul.mubr.f32.gmra.mxu0 %v88
    %v233 = vpop.f32.mrf.mxu0
    %v234 = vadd.f32 %v135, %v233
    %v235 = vpop.f32.mrf.mxu0
    %236 = vmatprep.mubr.f32.mxu0 0.0
    %237 = vmatmul.mubr.f32.gmra.mxu0 %v89
    %v238 = vpop.f32.mrf.mxu0
    %v239 = vadd.f32 %v135, %v238
    %v240 = vpop.f32.mrf.mxu0
    %241 = vmatprep.mubr.f32.mxu0 0.0
    %242 = vmatmul.mubr.f32.gmra.mxu0 %v90
    %v243 = vpop.f32.mrf.mxu0
    %v244 = vadd.f32 %v135, %v243
    %v245 = vpop.f32.mrf.mxu0
    %246 = vmatprep.mubr.f32.mxu0 0.0
    %247 = vmatmul.mubr.f32.gmra.mxu0 %v91
    %v248 = vpop.f32.mrf.mxu0
    %v249 = vadd.f32 %v135, %v248
    %v250 = vpop.f32.mrf.mxu0
    %251 = vmatprep.mubr.f32.mxu0 0.0
    %252 = vmatmul.mubr.f32.gmra.mxu0 %v92
    %v253 = vpop.f32.mrf.mxu0
    %v254 = vadd.f32 %v135, %v253
    %v255 = vpop.f32.mrf.mxu0
    %256 = vmatprep.mubr.f32.mxu0 0.0
    %257 = vmatmul.mubr.f32.gmra.mxu0 %v93
    %v258 = vpop.f32.mrf.mxu0
    %v259 = vadd.f32 %v135, %v258
    %v260 = vpop.f32.mrf.mxu0
    %261 = vmatprep.mubr.f32.mxu0 0.0
    %262 = vmatmul.mubr.f32.gmra.mxu0 %v94
    %v263 = vpop.f32.mrf.mxu0
    %v264 = vadd.f32 %v135, %v263
    %v265 = vpop.f32.mrf.mxu0
    %266 = vmatprep.mubr.f32.mxu0 0.0
    %267 = vmatmul.mubr.f32.gmra.mxu0 %v95
    %v268 = vpop.f32.mrf.mxu0
    %v269 = vadd.f32 %v135, %v268
    %v270 = vpop.f32.mrf.mxu0
    %271 = vmatprep.mubr.f32.mxu0 0.0
    %272 = vmatmul.mubr.f32.gmra.mxu0 %v96
    %v273 = vpop.f32.mrf.mxu0
    %v274 = vadd.f32 %v135, %v273
    %v275 = vpop.f32.mrf.mxu0
    %276 = vmatprep.mubr.f32.mxu0 0.0
    %277 = vmatmul.mubr.f32.gmra.mxu0 %v97
    %v278 = vpop.f32.mrf.mxu0
    %v279 = vadd.f32 %v135, %v278
    %v280 = vpop.f32.mrf.mxu0
    %281 = vmatprep.mubr.f32.mxu0 0.0
    %282 = vmatmul.mubr.f32.gmra.mxu0 %v98
    %v283 = vpop.f32.mrf.mxu0
    %v284 = vadd.f32 %v135, %v283
    %v285 = vpop.f32.mrf.mxu0
    %286 = vmatprep.mubr.f32.mxu0 0.0
    %287 = vmatmul.mubr.f32.gmra.mxu0 %v99
    %v288 = vpop.f32.mrf.mxu0
    %v289 = vadd.f32 %v135, %v288
    %v290 = vpop.f32.mrf.mxu0
    %291 = vmatprep.mubr.f32.mxu0 0.0
    %292 = vmatmul.mubr.f32.gmra.mxu0 %v100
    %v293 = vpop.f32.mrf.mxu0
    %v294 = vadd.f32 %v135, %v293
    %v295 = vpop.f32.mrf.mxu0
    %296 = vmatprep.mubr.f32.mxu0 0.0
    %297 = vmatmul.mubr.f32.gmra.mxu0 %v101
    %v298 = vpop.f32.mrf.mxu0
    %v299 = vadd.f32 %v135, %v298
    %v300 = vpop.f32.mrf.mxu0
    %301 = vmatprep.mubr.f32.mxu0 0.0
    %302 = vmatmul.mubr.f32.gmra.mxu0 %v102
    %v303 = vpop.f32.mrf.mxu0
    %v304 = vadd.f32 %v135, %v303
    %v305 = vpop.f32.mrf.mxu0
    %306 = vmatprep.mubr.f32.mxu0 0.0
    %307 = vmatmul.mubr.f32.gmra.mxu0 %v103
    %v308 = vpop.f32.mrf.mxu0
    %v309 = vadd.f32 %v135, %v308
    %v310 = vpop.f32.mrf.mxu0
    %311 = vmatprep.mubr.f32.mxu0 0.0
    %312 = vmatmul.mubr.f32.gmra.mxu0 %v104
    %v313 = vpop.f32.mrf.mxu0
    %v314 = vadd.f32 %v135, %v313
    %v315 = vpop.f32.mrf.mxu0
    %316 = vmatprep.mubr.f32.mxu0 0.0
    %317 = vmatmul.mubr.f32.gmra.mxu0 %v105
    %v318 = vpop.f32.mrf.mxu0
    %v319 = vadd.f32 %v135, %v318
    %v320 = vpop.f32.mrf.mxu0
    %321 = vmatprep.mubr.f32.mxu0 0.0
    %322 = vmatmul.mubr.f32.gmra.mxu0 %v106
    %v323 = vpop.f32.mrf.mxu0
    %v324 = vadd.f32 %v135, %v323
    %v325 = vpop.f32.mrf.mxu0
    %326 = vmatprep.mubr.f32.mxu0 0.0
    %327 = vmatmul.mubr.f32.gmra.mxu0 %v107
    %v328 = vpop.f32.mrf.mxu0
    %v329 = vadd.f32 %v135, %v328
    %v330 = vpop.f32.mrf.mxu0
    %331 = vmatprep.mubr.f32.mxu0 0.0
    %332 = vmatmul.mubr.f32.gmra.mxu0 %v108
    %v333 = vpop.f32.mrf.mxu0
    %v334 = vadd.f32 %v135, %v333
    %v335 = vpop.f32.mrf.mxu0
    %336 = vmatprep.mubr.f32.mxu0 0.0
    %337 = vmatmul.mubr.f32.gmra.mxu0 %v109
    %v338 = vpop.f32.mrf.mxu0
    %v339 = vadd.f32 %v135, %v338
    %v340 = vpop.f32.mrf.mxu0
    %341 = vmatprep.mubr.f32.mxu0 0.0
    %342 = vmatmul.mubr.f32.gmra.mxu0 %v110
    %v343 = vpop.f32.mrf.mxu0
    %v344 = vadd.f32 %v135, %v343
    %v345 = vpop.f32.mrf.mxu0
    %346 = vmatprep.mubr.f32.mxu0 0.0
    %347 = vmatmul.mubr.f32.gmra.mxu0 %v111
    %v348 = vpop.f32.mrf.mxu0
    %v349 = vadd.f32 %v135, %v348
    %v350 = vpop.f32.mrf.mxu0
    %351 = vmatprep.mubr.f32.mxu0 0.0
    %352 = vmatmul.mubr.f32.gmra.mxu0 %v112
    %v353 = vpop.f32.mrf.mxu0
    %v354 = vadd.f32 %v135, %v353
    %v355 = vpop.f32.mrf.mxu0
    %356 = vmatprep.mubr.f32.mxu0 0.0
    %357 = vmatmul.mubr.f32.gmra.mxu0 %v113
    %v358 = vpop.f32.mrf.mxu0
    %v359 = vadd.f32 %v135, %v358
    %v360 = vpop.f32.mrf.mxu0
    %361 = vdwg.mxu0
    %v362 = vtanh.pop %v204
    %v363 = vtanh.pop %v209
    %v364 = vtanh.pop %v214
    %v365 = vtanh.pop %v219
    %v366 = vtanh.pop %v224
    %v367 = vtanh.pop %v229
    %v368 = vtanh.pop %v234
    %v369 = vtanh.pop %v239
    %v370 = vtanh.pop %v244
    %v371 = vtanh.pop %v249
    %v372 = vtanh.pop %v254
    %v373 = vtanh.pop %v259
    %v374 = vtanh.pop %v264
    %v375 = vtanh.pop %v269
    %v376 = vtanh.pop %v274
    %v377 = vtanh.pop %v279
    %v378 = vtanh.pop %v284
    %v379 = vtanh.pop %v289
    %v380 = vtanh.pop %v294
    %v381 = vtanh.pop %v299
    %v382 = vtanh.pop %v304
    %v383 = vtanh.pop %v309
    %v384 = vtanh.pop %v314
    %v385 = vtanh.pop %v319
    %v386 = vtanh.pop %v324
    %v387 = vtanh.pop %v329
    %v388 = vtanh.pop %v334
    %v389 = vtanh.pop %v339
    %v390 = vtanh.pop %v344
    %v391 = vtanh.pop %v349
    %v392 = vtanh.pop %v354
    %v393 = vtanh.pop %v359
    %v394 = vld [vmem:[#allocation7] sm:$0xff]
    %v395 = vld [vmem:[#allocation7 + $0x8] sm:$0xff]
    %v396 = vld [vmem:[#allocation7 + $0x10] sm:$0xff]
    %v397 = vld [vmem:[#allocation7 + $0x18] sm:$0xff]
    %v398 = vld [vmem:[#allocation7 + $0x20] sm:$0xff]
    %v399 = vld [vmem:[#allocation7 + $0x28] sm:$0xff]
    %v400 = vld [vmem:[#allocation7 + $0x30] sm:$0xff]
    %v401 = vld [vmem:[#allocation7 + $0x38] sm:$0xff]
    %v402 = vld [vmem:[#allocation7 + $0x40] sm:$0xff]
    %v403 = vld [vmem:[#allocation7 + $0x48] sm:$0xff]
    %v404 = vld [vmem:[#allocation7 + $0x50] sm:$0xff]
    %v405 = vld [vmem:[#allocation7 + $0x58] sm:$0xff]
    %v406 = vld [vmem:[#allocation7 + $0x60] sm:$0xff]
    %v407 = vld [vmem:[#allocation7 + $0x68] sm:$0xff]
    %v408 = vld [vmem:[#allocation7 + $0x70] sm:$0xff]
    %v409 = vld [vmem:[#allocation7 + $0x78] sm:$0xff]
    %v410 = vld [vmem:[%s4] sm:$0x1]
    %v412 = vlaneseq
    %v413 = vshrl.u32 %v412, 7
    %v414 = vsub.s32 0, %v413
    %v415 = vrot.slane %v410, %v414
    %417 = vmatprep.subr.mxu0 0.0
    %418 = vmatpush1.msra.mxu0 %v409
    %419 = vmatprep.subr.mxu0 0.0
    %420 = vmatpush1.msra.mxu0 %v408
    %421 = vmatprep.subr.mxu0 0.0
    %422 = vmatpush1.msra.mxu0 %v407
    %423 = vmatprep.subr.mxu0 0.0
    %424 = vmatpush1.msra.mxu0 %v406
    %425 = vmatprep.subr.mxu0 0.0
    %426 = vmatpush1.msra.mxu0 %v405
    %427 = vmatprep.subr.mxu0 0.0
    %428 = vmatpush1.msra.mxu0 %v404
    %429 = vmatprep.subr.mxu0 0.0
    %430 = vmatpush1.msra.mxu0 %v403
    %431 = vmatprep.subr.mxu0 0.0
    %432 = vmatpush1.msra.mxu0 %v402
    %433 = vmatprep.subr.mxu0 0.0
    %434 = vmatpush1.msra.mxu0 %v401
    %435 = vmatprep.subr.mxu0 0.0
    %436 = vmatpush1.msra.mxu0 %v400
    %437 = vmatprep.subr.mxu0 0.0
    %438 = vmatpush1.msra.mxu0 %v399
    %439 = vmatprep.subr.mxu0 0.0
    %440 = vmatpush1.msra.mxu0 %v398
    %441 = vmatprep.subr.mxu0 0.0
    %442 = vmatpush1.msra.mxu0 %v397
    %443 = vmatprep.subr.mxu0 0.0
    %444 = vmatpush1.msra.mxu0 %v396
    %445 = vmatprep.subr.mxu0 0.0
    %446 = vmatpush1.msra.mxu0 %v395
    %447 = vmatprep.subr.mxu0 0.0
    %448 = vmatpush1.msra.mxu0 %v394
    %449 = vmatprep.subr.mxu0 0.0
    %450 = vmatpush2.msra.mxu0 0.0
    %451 = vmatprep.subr.mxu0 0.0
    %452 = vmatpush2.msra.mxu0 0.0
    %453 = vmatprep.subr.mxu0 0.0
    %454 = vmatpush2.msra.mxu0 0.0
    %455 = vmatprep.subr.mxu0 0.0
    %456 = vmatpush2.msra.mxu0 0.0
    %457 = vmatprep.subr.mxu0 0.0
    %458 = vmatpush2.msra.mxu0 0.0
    %459 = vmatprep.subr.mxu0 0.0
    %460 = vmatpush2.msra.mxu0 0.0
    %461 = vmatprep.subr.mxu0 0.0
    %462 = vmatpush2.msra.mxu0 0.0
    %463 = vmatprep.subr.mxu0 0.0
    %464 = vmatpush2.msra.mxu0 0.0
    %465 = vmatprep.subr.mxu0 0.0
    %466 = vmatpush2.msra.mxu0 0.0
    %467 = vmatprep.subr.mxu0 0.0
    %468 = vmatpush2.msra.mxu0 0.0
    %469 = vmatprep.subr.mxu0 0.0
    %470 = vmatpush2.msra.mxu0 0.0
    %471 = vmatprep.subr.mxu0 0.0
    %472 = vmatpush2.msra.mxu0 0.0
    %473 = vmatprep.subr.mxu0 0.0
    %474 = vmatpush2.msra.mxu0 0.0
    %475 = vmatprep.subr.mxu0 0.0
    %476 = vmatpush2.msra.mxu0 0.0
    %477 = vmatprep.subr.mxu0 0.0
    %478 = vmatpush2.msra.mxu0 0.0
    %479 = vmatprep.subr.mxu0 0.0
    %480 = vmatpush2.msra.mxu0 0.0
    %481 = vmatprep.mubr.f32.mxu0 0.0
    %482 = vmatmul.mubr.f32.gmra.mxu0 %v362
    %v483 = vpop.f32.mrf.mxu0
    %v484 = vadd.f32 %v415, %v483
    %v485 = vpop.f32.mrf.mxu0
    %486 = vmatprep.mubr.f32.mxu0 0.0
    %487 = vmatmul.mubr.f32.gmra.mxu0 %v363
    %v488 = vpop.f32.mrf.mxu0
    %v489 = vadd.f32 %v415, %v488
    %v490 = vpop.f32.mrf.mxu0
    %491 = vmatprep.mubr.f32.mxu0 0.0
    %492 = vmatmul.mubr.f32.gmra.mxu0 %v364
    %v493 = vpop.f32.mrf.mxu0
    %v494 = vadd.f32 %v415, %v493
    %v495 = vpop.f32.mrf.mxu0
    %496 = vmatprep.mubr.f32.mxu0 0.0
    %497 = vmatmul.mubr.f32.gmra.mxu0 %v365
    %v498 = vpop.f32.mrf.mxu0
    %v499 = vadd.f32 %v415, %v498
    %v500 = vpop.f32.mrf.mxu0
    %501 = vmatprep.mubr.f32.mxu0 0.0
    %502 = vmatmul.mubr.f32.gmra.mxu0 %v366
    %v503 = vpop.f32.mrf.mxu0
    %v504 = vadd.f32 %v415, %v503
    %v505 = vpop.f32.mrf.mxu0
    %506 = vmatprep.mubr.f32.mxu0 0.0
    %507 = vmatmul.mubr.f32.gmra.mxu0 %v367
    %v508 = vpop.f32.mrf.mxu0
    %v509 = vadd.f32 %v415, %v508
    %v510 = vpop.f32.mrf.mxu0
    %511 = vmatprep.mubr.f32.mxu0 0.0
    %512 = vmatmul.mubr.f32.gmra.mxu0 %v368
    %v513 = vpop.f32.mrf.mxu0
    %v514 = vadd.f32 %v415, %v513
    %v515 = vpop.f32.mrf.mxu0
    %516 = vmatprep.mubr.f32.mxu0 0.0
    %517 = vmatmul.mubr.f32.gmra.mxu0 %v369
    %v518 = vpop.f32.mrf.mxu0
    %v519 = vadd.f32 %v415, %v518
    %v520 = vpop.f32.mrf.mxu0
    %521 = vmatprep.mubr.f32.mxu0 0.0
    %522 = vmatmul.mubr.f32.gmra.mxu0 %v370
    %v523 = vpop.f32.mrf.mxu0
    %v524 = vadd.f32 %v415, %v523
    %v525 = vpop.f32.mrf.mxu0
    %526 = vmatprep.mubr.f32.mxu0 0.0
    %527 = vmatmul.mubr.f32.gmra.mxu0 %v371
    %v528 = vpop.f32.mrf.mxu0
    %v529 = vadd.f32 %v415, %v528
    %v530 = vpop.f32.mrf.mxu0
    %531 = vmatprep.mubr.f32.mxu0 0.0
    %532 = vmatmul.mubr.f32.gmra.mxu0 %v372
    %v533 = vpop.f32.mrf.mxu0
    %v534 = vadd.f32 %v415, %v533
    %v535 = vpop.f32.mrf.mxu0
    %536 = vmatprep.mubr.f32.mxu0 0.0
    %537 = vmatmul.mubr.f32.gmra.mxu0 %v373
    %v538 = vpop.f32.mrf.mxu0
    %v539 = vadd.f32 %v415, %v538
    %v540 = vpop.f32.mrf.mxu0
    %541 = vmatprep.mubr.f32.mxu0 0.0
    %542 = vmatmul.mubr.f32.gmra.mxu0 %v374
    %v543 = vpop.f32.mrf.mxu0
    %v544 = vadd.f32 %v415, %v543
    %v545 = vpop.f32.mrf.mxu0
    %546 = vmatprep.mubr.f32.mxu0 0.0
    %547 = vmatmul.mubr.f32.gmra.mxu0 %v375
    %v548 = vpop.f32.mrf.mxu0
    %v549 = vadd.f32 %v415, %v548
    %v550 = vpop.f32.mrf.mxu0
    %551 = vmatprep.mubr.f32.mxu0 0.0
    %552 = vmatmul.mubr.f32.gmra.mxu0 %v376
    %v553 = vpop.f32.mrf.mxu0
    %v554 = vadd.f32 %v415, %v553
    %v555 = vpop.f32.mrf.mxu0
    %556 = vmatprep.mubr.f32.mxu0 0.0
    %557 = vmatmul.mubr.f32.gmra.mxu0 %v377
    %v558 = vpop.f32.mrf.mxu0
    %v559 = vadd.f32 %v415, %v558
    %v560 = vpop.f32.mrf.mxu0
    %561 = vmatprep.mubr.f32.mxu0 0.0
    %562 = vmatmul.mubr.f32.gmra.mxu0 %v378
    %v563 = vpop.f32.mrf.mxu0
    %v564 = vadd.f32 %v415, %v563
    %v565 = vpop.f32.mrf.mxu0
    %566 = vmatprep.mubr.f32.mxu0 0.0
    %567 = vmatmul.mubr.f32.gmra.mxu0 %v379
    %v568 = vpop.f32.mrf.mxu0
    %v569 = vadd.f32 %v415, %v568
    %v570 = vpop.f32.mrf.mxu0
    %571 = vmatprep.mubr.f32.mxu0 0.0
    %572 = vmatmul.mubr.f32.gmra.mxu0 %v380
    %v573 = vpop.f32.mrf.mxu0
    %v574 = vadd.f32 %v415, %v573
    %v575 = vpop.f32.mrf.mxu0
    %576 = vmatprep.mubr.f32.mxu0 0.0
    %577 = vmatmul.mubr.f32.gmra.mxu0 %v381
    %v578 = vpop.f32.mrf.mxu0
    %v579 = vadd.f32 %v415, %v578
    %v580 = vpop.f32.mrf.mxu0
    %581 = vmatprep.mubr.f32.mxu0 0.0
    %582 = vmatmul.mubr.f32.gmra.mxu0 %v382
    %v583 = vpop.f32.mrf.mxu0
    %v584 = vadd.f32 %v415, %v583
    %v585 = vpop.f32.mrf.mxu0
    %586 = vmatprep.mubr.f32.mxu0 0.0
    %587 = vmatmul.mubr.f32.gmra.mxu0 %v383
    %v588 = vpop.f32.mrf.mxu0
    %v589 = vadd.f32 %v415, %v588
    %v590 = vpop.f32.mrf.mxu0
    %591 = vmatprep.mubr.f32.mxu0 0.0
    %592 = vmatmul.mubr.f32.gmra.mxu0 %v384
    %v593 = vpop.f32.mrf.mxu0
    %v594 = vadd.f32 %v415, %v593
    %v595 = vpop.f32.mrf.mxu0
    %596 = vmatprep.mubr.f32.mxu0 0.0
    %597 = vmatmul.mubr.f32.gmra.mxu0 %v385
    %v598 = vpop.f32.mrf.mxu0
    %v599 = vadd.f32 %v415, %v598
    %v600 = vpop.f32.mrf.mxu0
    %601 = vmatprep.mubr.f32.mxu0 0.0
    %602 = vmatmul.mubr.f32.gmra.mxu0 %v386
    %v603 = vpop.f32.mrf.mxu0
    %v604 = vadd.f32 %v415, %v603
    %v605 = vpop.f32.mrf.mxu0
    %606 = vmatprep.mubr.f32.mxu0 0.0
    %607 = vmatmul.mubr.f32.gmra.mxu0 %v387
    %v608 = vpop.f32.mrf.mxu0
    %v609 = vadd.f32 %v415, %v608
    %v610 = vpop.f32.mrf.mxu0
    %611 = vmatprep.mubr.f32.mxu0 0.0
    %612 = vmatmul.mubr.f32.gmra.mxu0 %v388
    %v613 = vpop.f32.mrf.mxu0
    %v614 = vadd.f32 %v415, %v613
    %v615 = vpop.f32.mrf.mxu0
    %616 = vmatprep.mubr.f32.mxu0 0.0
    %617 = vmatmul.mubr.f32.gmra.mxu0 %v389
    %v618 = vpop.f32.mrf.mxu0
    %v619 = vadd.f32 %v415, %v618
    %v620 = vpop.f32.mrf.mxu0
    %621 = vmatprep.mubr.f32.mxu0 0.0
    %622 = vmatmul.mubr.f32.gmra.mxu0 %v390
    %v623 = vpop.f32.mrf.mxu0
    %v624 = vadd.f32 %v415, %v623
    %v625 = vpop.f32.mrf.mxu0
    %626 = vmatprep.mubr.f32.mxu0 0.0
    %627 = vmatmul.mubr.f32.gmra.mxu0 %v391
    %v628 = vpop.f32.mrf.mxu0
    %v629 = vadd.f32 %v415, %v628
    %v630 = vpop.f32.mrf.mxu0
    %631 = vmatprep.mubr.f32.mxu0 0.0
    %632 = vmatmul.mubr.f32.gmra.mxu0 %v392
    %v633 = vpop.f32.mrf.mxu0
    %v634 = vadd.f32 %v415, %v633
    %v635 = vpop.f32.mrf.mxu0
    %636 = vmatprep.mubr.f32.mxu0 0.0
    %637 = vmatmul.mubr.f32.gmra.mxu0 %v393
    %v638 = vpop.f32.mrf.mxu0
    %v639 = vadd.f32 %v415, %v638
    %v640 = vpop.f32.mrf.mxu0
    %641 = vdwg.mxu0
    %v642 = vtanh.pop %v484
    %v643 = vtanh.pop %v489
    %v644 = vtanh.pop %v494
    %v645 = vtanh.pop %v499
    %v646 = vtanh.pop %v504
    %v647 = vtanh.pop %v509
    %v648 = vtanh.pop %v514
    %v649 = vtanh.pop %v519
    %v650 = vtanh.pop %v524
    %v651 = vtanh.pop %v529
    %v652 = vtanh.pop %v534
    %v653 = vtanh.pop %v539
    %v654 = vtanh.pop %v544
    %v655 = vtanh.pop %v549
    %v656 = vtanh.pop %v554
    %v657 = vtanh.pop %v559
    %v658 = vtanh.pop %v564
    %v659 = vtanh.pop %v569
    %v660 = vtanh.pop %v574
    %v661 = vtanh.pop %v579
    %v662 = vtanh.pop %v584
    %v663 = vtanh.pop %v589
    %v664 = vtanh.pop %v594
    %v665 = vtanh.pop %v599
    %v666 = vtanh.pop %v604
    %v667 = vtanh.pop %v609
    %v668 = vtanh.pop %v614
    %v669 = vtanh.pop %v619
    %v670 = vtanh.pop %v624
    %v671 = vtanh.pop %v629
    %v672 = vtanh.pop %v634
    %v673 = vtanh.pop %v639
    %v674 = vld [vmem:[#allocation8] sm:$0xff]
    %v675 = vld [vmem:[#allocation8 + $0x8] sm:$0xff]
    %v676 = vld [vmem:[#allocation8 + $0x10] sm:$0xff]
    %v677 = vld [vmem:[#allocation8 + $0x18] sm:$0xff]
    %v678 = vld [vmem:[#allocation8 + $0x20] sm:$0xff]
    %v679 = vld [vmem:[#allocation8 + $0x28] sm:$0xff]
    %v680 = vld [vmem:[#allocation8 + $0x30] sm:$0xff]
    %v681 = vld [vmem:[#allocation8 + $0x38] sm:$0xff]
    %v682 = vld [vmem:[#allocation8 + $0x40] sm:$0xff]
    %v683 = vld [vmem:[#allocation8 + $0x48] sm:$0xff]
    %v684 = vld [vmem:[#allocation8 + $0x50] sm:$0xff]
    %v685 = vld [vmem:[#allocation8 + $0x58] sm:$0xff]
    %v686 = vld [vmem:[#allocation8 + $0x60] sm:$0xff]
    %v687 = vld [vmem:[#allocation8 + $0x68] sm:$0xff]
    %v688 = vld [vmem:[#allocation8 + $0x70] sm:$0xff]
    %v689 = vld [vmem:[#allocation8 + $0x78] sm:$0xff]
    %v690 = vld [vmem:[%s6] sm:$0x1]
    %v692 = vlaneseq
    %v693 = vshrl.u32 %v692, 7
    %v694 = vsub.s32 0, %v693
    %v695 = vrot.slane %v690, %v694
    %697 = vmatprep.subr.mxu0 0.0
    %698 = vmatpush1.msra.mxu0 %v689
    %699 = vmatprep.subr.mxu0 0.0
    %700 = vmatpush1.msra.mxu0 %v688
    %701 = vmatprep.subr.mxu0 0.0
    %702 = vmatpush1.msra.mxu0 %v687
    %703 = vmatprep.subr.mxu0 0.0
    %704 = vmatpush1.msra.mxu0 %v686
    %705 = vmatprep.subr.mxu0 0.0
    %706 = vmatpush1.msra.mxu0 %v685
    %707 = vmatprep.subr.mxu0 0.0
    %708 = vmatpush1.msra.mxu0 %v684
    %709 = vmatprep.subr.mxu0 0.0
    %710 = vmatpush1.msra.mxu0 %v683
    %711 = vmatprep.subr.mxu0 0.0
    %712 = vmatpush1.msra.mxu0 %v682
    %713 = vmatprep.subr.mxu0 0.0
    %714 = vmatpush1.msra.mxu0 %v681
    %715 = vmatprep.subr.mxu0 0.0
    %716 = vmatpush1.msra.mxu0 %v680
    %717 = vmatprep.subr.mxu0 0.0
    %718 = vmatpush1.msra.mxu0 %v679
    %719 = vmatprep.subr.mxu0 0.0
    %720 = vmatpush1.msra.mxu0 %v678
    %721 = vmatprep.subr.mxu0 0.0
    %722 = vmatpush1.msra.mxu0 %v677
    %723 = vmatprep.subr.mxu0 0.0
    %724 = vmatpush1.msra.mxu0 %v676
    %725 = vmatprep.subr.mxu0 0.0
    %726 = vmatpush1.msra.mxu0 %v675
    %727 = vmatprep.subr.mxu0 0.0
    %728 = vmatpush1.msra.mxu0 %v674
    %729 = vmatprep.subr.mxu0 0.0
    %730 = vmatpush2.msra.mxu0 0.0
    %731 = vmatprep.subr.mxu0 0.0
    %732 = vmatpush2.msra.mxu0 0.0
    %733 = vmatprep.subr.mxu0 0.0
    %734 = vmatpush2.msra.mxu0 0.0
    %735 = vmatprep.subr.mxu0 0.0
    %736 = vmatpush2.msra.mxu0 0.0
    %737 = vmatprep.subr.mxu0 0.0
    %738 = vmatpush2.msra.mxu0 0.0
    %739 = vmatprep.subr.mxu0 0.0
    %740 = vmatpush2.msra.mxu0 0.0
    %741 = vmatprep.subr.mxu0 0.0
    %742 = vmatpush2.msra.mxu0 0.0
    %743 = vmatprep.subr.mxu0 0.0
    %744 = vmatpush2.msra.mxu0 0.0
    %745 = vmatprep.subr.mxu0 0.0
    %746 = vmatpush2.msra.mxu0 0.0
    %747 = vmatprep.subr.mxu0 0.0
    %748 = vmatpush2.msra.mxu0 0.0
    %749 = vmatprep.subr.mxu0 0.0
    %750 = vmatpush2.msra.mxu0 0.0
    %751 = vmatprep.subr.mxu0 0.0
    %752 = vmatpush2.msra.mxu0 0.0
    %753 = vmatprep.subr.mxu0 0.0
    %754 = vmatpush2.msra.mxu0 0.0
    %755 = vmatprep.subr.mxu0 0.0
    %756 = vmatpush2.msra.mxu0 0.0
    %757 = vmatprep.subr.mxu0 0.0
    %758 = vmatpush2.msra.mxu0 0.0
    %759 = vmatprep.subr.mxu0 0.0
    %760 = vmatpush2.msra.mxu0 0.0
    %761 = vmatprep.mubr.f32.mxu0 0.0
    %762 = vmatmul.mubr.f32.gmra.mxu0 %v642
    %v763 = vpop.f32.mrf.mxu0
    %v764 = vadd.f32 %v695, %v763
    %v765 = vpop.f32.mrf.mxu0
    %766 = vmatprep.mubr.f32.mxu0 0.0
    %767 = vmatmul.mubr.f32.gmra.mxu0 %v643
    %v768 = vpop.f32.mrf.mxu0
    %v769 = vadd.f32 %v695, %v768
    %v770 = vpop.f32.mrf.mxu0
    %771 = vmatprep.mubr.f32.mxu0 0.0
    %772 = vmatmul.mubr.f32.gmra.mxu0 %v644
    %v773 = vpop.f32.mrf.mxu0
    %v774 = vadd.f32 %v695, %v773
    %v775 = vpop.f32.mrf.mxu0
    %776 = vmatprep.mubr.f32.mxu0 0.0
    %777 = vmatmul.mubr.f32.gmra.mxu0 %v645
    %v778 = vpop.f32.mrf.mxu0
    %v779 = vadd.f32 %v695, %v778
    %v780 = vpop.f32.mrf.mxu0
    %781 = vmatprep.mubr.f32.mxu0 0.0
    %782 = vmatmul.mubr.f32.gmra.mxu0 %v646
    %v783 = vpop.f32.mrf.mxu0
    %v784 = vadd.f32 %v695, %v783
    %v785 = vpop.f32.mrf.mxu0
    %786 = vmatprep.mubr.f32.mxu0 0.0
    %787 = vmatmul.mubr.f32.gmra.mxu0 %v647
    %v788 = vpop.f32.mrf.mxu0
    %v789 = vadd.f32 %v695, %v788
    %v790 = vpop.f32.mrf.mxu0
    %791 = vmatprep.mubr.f32.mxu0 0.0
    %792 = vmatmul.mubr.f32.gmra.mxu0 %v648
    %v793 = vpop.f32.mrf.mxu0
    %v794 = vadd.f32 %v695, %v793
    %v795 = vpop.f32.mrf.mxu0
    %796 = vmatprep.mubr.f32.mxu0 0.0
    %797 = vmatmul.mubr.f32.gmra.mxu0 %v649
    %v798 = vpop.f32.mrf.mxu0
    %v799 = vadd.f32 %v695, %v798
    %v800 = vpop.f32.mrf.mxu0
    %801 = vmatprep.mubr.f32.mxu0 0.0
    %802 = vmatmul.mubr.f32.gmra.mxu0 %v650
    %v803 = vpop.f32.mrf.mxu0
    %v804 = vadd.f32 %v695, %v803
    %v805 = vpop.f32.mrf.mxu0
    %806 = vmatprep.mubr.f32.mxu0 0.0
    %807 = vmatmul.mubr.f32.gmra.mxu0 %v651
    %v808 = vpop.f32.mrf.mxu0
    %v809 = vadd.f32 %v695, %v808
    %v810 = vpop.f32.mrf.mxu0
    %811 = vmatprep.mubr.f32.mxu0 0.0
    %812 = vmatmul.mubr.f32.gmra.mxu0 %v652
    %v813 = vpop.f32.mrf.mxu0
    %v814 = vadd.f32 %v695, %v813
    %v815 = vpop.f32.mrf.mxu0
    %816 = vmatprep.mubr.f32.mxu0 0.0
    %817 = vmatmul.mubr.f32.gmra.mxu0 %v653
    %v818 = vpop.f32.mrf.mxu0
    %v819 = vadd.f32 %v695, %v818
    %v820 = vpop.f32.mrf.mxu0
    %821 = vmatprep.mubr.f32.mxu0 0.0
    %822 = vmatmul.mubr.f32.gmra.mxu0 %v654
    %v823 = vpop.f32.mrf.mxu0
    %v824 = vadd.f32 %v695, %v823
    %v825 = vpop.f32.mrf.mxu0
    %826 = vmatprep.mubr.f32.mxu0 0.0
    %827 = vmatmul.mubr.f32.gmra.mxu0 %v655
    %v828 = vpop.f32.mrf.mxu0
    %v829 = vadd.f32 %v695, %v828
    %v830 = vpop.f32.mrf.mxu0
    %831 = vmatprep.mubr.f32.mxu0 0.0
    %832 = vmatmul.mubr.f32.gmra.mxu0 %v656
    %v833 = vpop.f32.mrf.mxu0
    %v834 = vadd.f32 %v695, %v833
    %v835 = vpop.f32.mrf.mxu0
    %836 = vmatprep.mubr.f32.mxu0 0.0
    %837 = vmatmul.mubr.f32.gmra.mxu0 %v657
    %v838 = vpop.f32.mrf.mxu0
    %v839 = vadd.f32 %v695, %v838
    %v840 = vpop.f32.mrf.mxu0
    %841 = vmatprep.mubr.f32.mxu0 0.0
    %842 = vmatmul.mubr.f32.gmra.mxu0 %v658
    %v843 = vpop.f32.mrf.mxu0
    %v844 = vadd.f32 %v695, %v843
    %v845 = vpop.f32.mrf.mxu0
    %846 = vmatprep.mubr.f32.mxu0 0.0
    %847 = vmatmul.mubr.f32.gmra.mxu0 %v659
    %v848 = vpop.f32.mrf.mxu0
    %v849 = vadd.f32 %v695, %v848
    %v850 = vpop.f32.mrf.mxu0
    %851 = vmatprep.mubr.f32.mxu0 0.0
    %852 = vmatmul.mubr.f32.gmra.mxu0 %v660
    %v853 = vpop.f32.mrf.mxu0
    %v854 = vadd.f32 %v695, %v853
    %v855 = vpop.f32.mrf.mxu0
    %856 = vmatprep.mubr.f32.mxu0 0.0
    %857 = vmatmul.mubr.f32.gmra.mxu0 %v661
    %v858 = vpop.f32.mrf.mxu0
    %v859 = vadd.f32 %v695, %v858
    %v860 = vpop.f32.mrf.mxu0
    %861 = vmatprep.mubr.f32.mxu0 0.0
    %862 = vmatmul.mubr.f32.gmra.mxu0 %v662
    %v863 = vpop.f32.mrf.mxu0
    %v864 = vadd.f32 %v695, %v863
    %v865 = vpop.f32.mrf.mxu0
    %866 = vmatprep.mubr.f32.mxu0 0.0
    %867 = vmatmul.mubr.f32.gmra.mxu0 %v663
    %v868 = vpop.f32.mrf.mxu0
    %v869 = vadd.f32 %v695, %v868
    %v870 = vpop.f32.mrf.mxu0
    %871 = vmatprep.mubr.f32.mxu0 0.0
    %872 = vmatmul.mubr.f32.gmra.mxu0 %v664
    %v873 = vpop.f32.mrf.mxu0
    %v874 = vadd.f32 %v695, %v873
    %v875 = vpop.f32.mrf.mxu0
    %876 = vmatprep.mubr.f32.mxu0 0.0
    %877 = vmatmul.mubr.f32.gmra.mxu0 %v665
    %v878 = vpop.f32.mrf.mxu0
    %v879 = vadd.f32 %v695, %v878
    %v880 = vpop.f32.mrf.mxu0
    %881 = vmatprep.mubr.f32.mxu0 0.0
    %882 = vmatmul.mubr.f32.gmra.mxu0 %v666
    %v883 = vpop.f32.mrf.mxu0
    %v884 = vadd.f32 %v695, %v883
    %v885 = vpop.f32.mrf.mxu0
    %886 = vmatprep.mubr.f32.mxu0 0.0
    %887 = vmatmul.mubr.f32.gmra.mxu0 %v667
    %v888 = vpop.f32.mrf.mxu0
    %v889 = vadd.f32 %v695, %v888
    %v890 = vpop.f32.mrf.mxu0
    %891 = vmatprep.mubr.f32.mxu0 0.0
    %892 = vmatmul.mubr.f32.gmra.mxu0 %v668
    %v893 = vpop.f32.mrf.mxu0
    %v894 = vadd.f32 %v695, %v893
    %v895 = vpop.f32.mrf.mxu0
    %896 = vmatprep.mubr.f32.mxu0 0.0
    %897 = vmatmul.mubr.f32.gmra.mxu0 %v669
    %v898 = vpop.f32.mrf.mxu0
    %v899 = vadd.f32 %v695, %v898
    %v900 = vpop.f32.mrf.mxu0
    %901 = vmatprep.mubr.f32.mxu0 0.0
    %902 = vmatmul.mubr.f32.gmra.mxu0 %v670
    %v903 = vpop.f32.mrf.mxu0
    %v904 = vadd.f32 %v695, %v903
    %v905 = vpop.f32.mrf.mxu0
    %906 = vmatprep.mubr.f32.mxu0 0.0
    %907 = vmatmul.mubr.f32.gmra.mxu0 %v671
    %v908 = vpop.f32.mrf.mxu0
    %v909 = vadd.f32 %v695, %v908
    %v910 = vpop.f32.mrf.mxu0
    %911 = vmatprep.mubr.f32.mxu0 0.0
    %912 = vmatmul.mubr.f32.gmra.mxu0 %v672
    %v913 = vpop.f32.mrf.mxu0
    %v914 = vadd.f32 %v695, %v913
    %v915 = vpop.f32.mrf.mxu0
    %916 = vmatprep.mubr.f32.mxu0 0.0
    %917 = vmatmul.mubr.f32.gmra.mxu0 %v673
    %v918 = vpop.f32.mrf.mxu0
    %v919 = vadd.f32 %v695, %v918
    %v920 = vpop.f32.mrf.mxu0
    %921 = vdwg.mxu0
    %922 = vmax.xlane.f32.xlu0 %v764
    %v923 = vpop.xlane.xlu0 %922
    %924 = vmax.xlane.f32.xlu0 %v769
    %v925 = vpop.xlane.xlu0 %924
    %926 = vmax.xlane.f32.xlu0 %v774
    %v927 = vpop.xlane.xlu0 %926
    %928 = vmax.xlane.f32.xlu0 %v779
    %v929 = vpop.xlane.xlu0 %928
    %930 = vmax.xlane.f32.xlu0 %v784
    %v931 = vpop.xlane.xlu0 %930
    %932 = vmax.xlane.f32.xlu0 %v789
    %v933 = vpop.xlane.xlu0 %932
    %934 = vmax.xlane.f32.xlu0 %v794
    %v935 = vpop.xlane.xlu0 %934
    %936 = vmax.xlane.f32.xlu0 %v799
    %v937 = vpop.xlane.xlu0 %936
    %938 = vmax.xlane.f32.xlu0 %v804
    %v939 = vpop.xlane.xlu0 %938
    %940 = vmax.xlane.f32.xlu0 %v809
    %v941 = vpop.xlane.xlu0 %940
    %942 = vmax.xlane.f32.xlu0 %v814
    %v943 = vpop.xlane.xlu0 %942
    %944 = vmax.xlane.f32.xlu0 %v819
    %v945 = vpop.xlane.xlu0 %944
    %946 = vmax.xlane.f32.xlu0 %v824
    %v947 = vpop.xlane.xlu0 %946
    %948 = vmax.xlane.f32.xlu0 %v829
    %v949 = vpop.xlane.xlu0 %948
    %950 = vmax.xlane.f32.xlu0 %v834
    %v951 = vpop.xlane.xlu0 %950
    %952 = vmax.xlane.f32.xlu0 %v839
    %v953 = vpop.xlane.xlu0 %952
    %954 = vmax.xlane.f32.xlu0 %v844
    %v955 = vpop.xlane.xlu0 %954
    %956 = vmax.xlane.f32.xlu0 %v849
    %v957 = vpop.xlane.xlu0 %956
    %958 = vmax.xlane.f32.xlu0 %v854
    %v959 = vpop.xlane.xlu0 %958
    %960 = vmax.xlane.f32.xlu0 %v859
    %v961 = vpop.xlane.xlu0 %960
    %962 = vmax.xlane.f32.xlu0 %v864
    %v963 = vpop.xlane.xlu0 %962
    %964 = vmax.xlane.f32.xlu0 %v869
    %v965 = vpop.xlane.xlu0 %964
    %966 = vmax.xlane.f32.xlu0 %v874
    %v967 = vpop.xlane.xlu0 %966
    %968 = vmax.xlane.f32.xlu0 %v879
    %v969 = vpop.xlane.xlu0 %968
    %970 = vmax.xlane.f32.xlu0 %v884
    %v971 = vpop.xlane.xlu0 %970
    %972 = vmax.xlane.f32.xlu0 %v889
    %v973 = vpop.xlane.xlu0 %972
    %974 = vmax.xlane.f32.xlu0 %v894
    %v975 = vpop.xlane.xlu0 %974
    %976 = vmax.xlane.f32.xlu0 %v899
    %v977 = vpop.xlane.xlu0 %976
    %978 = vmax.xlane.f32.xlu0 %v904
    %v979 = vpop.xlane.xlu0 %978
    %980 = vmax.xlane.f32.xlu0 %v909
    %v981 = vpop.xlane.xlu0 %980
    %982 = vmax.xlane.f32.xlu0 %v914
    %v983 = vpop.xlane.xlu0 %982
    %984 = vmax.xlane.f32.xlu0 %v919
    %v985 = vpop.xlane.xlu0 %984
    %v986 = vsub.f32 %v764, %v923
    %v987 = vsub.f32 %v769, %v925
    %v988 = vsub.f32 %v774, %v927
    %v989 = vsub.f32 %v779, %v929
    %v990 = vsub.f32 %v784, %v931
    %v991 = vsub.f32 %v789, %v933
    %v992 = vsub.f32 %v794, %v935
    %v993 = vsub.f32 %v799, %v937
    %v994 = vsub.f32 %v804, %v939
    %v995 = vsub.f32 %v809, %v941
    %v996 = vsub.f32 %v814, %v943
    %v997 = vsub.f32 %v819, %v945
    %v998 = vsub.f32 %v824, %v947
    %v999 = vsub.f32 %v829, %v949
    %v1000 = vsub.f32 %v834, %v951
    %v1001 = vsub.f32 %v839, %v953
    %v1002 = vsub.f32 %v844, %v955
    %v1003 = vsub.f32 %v849, %v957
    %v1004 = vsub.f32 %v854, %v959
    %v1005 = vsub.f32 %v859, %v961
    %v1006 = vsub.f32 %v864, %v963
    %v1007 = vsub.f32 %v869, %v965
    %v1008 = vsub.f32 %v874, %v967
    %v1009 = vsub.f32 %v879, %v969
    %v1010 = vsub.f32 %v884, %v971
    %v1011 = vsub.f32 %v889, %v973
    %v1012 = vsub.f32 %v894, %v975
    %v1013 = vsub.f32 %v899, %v977
    %v1014 = vsub.f32 %v904, %v979
    %v1015 = vsub.f32 %v909, %v981
    %v1016 = vsub.f32 %v914, %v983
    %v1017 = vsub.f32 %v919, %v985
    %v1018 = vmul.f32 %v986, 1.442695
    %v1019 = vpow.pop %v1018
    %v1020 = vmul.f32 %v987, 1.442695
    %v1021 = vpow.pop %v1020
    %v1022 = vmul.f32 %v988, 1.442695
    %v1023 = vpow.pop %v1022
    %v1024 = vmul.f32 %v989, 1.442695
    %v1025 = vpow.pop %v1024
    %v1026 = vmul.f32 %v990, 1.442695
    %v1027 = vpow.pop %v1026
    %v1028 = vmul.f32 %v991, 1.442695
    %v1029 = vpow.pop %v1028
    %v1030 = vmul.f32 %v992, 1.442695
    %v1031 = vpow.pop %v1030
    %v1032 = vmul.f32 %v993, 1.442695
    %v1033 = vpow.pop %v1032
    %v1034 = vmul.f32 %v994, 1.442695
    %v1035 = vpow.pop %v1034
    %v1036 = vmul.f32 %v995, 1.442695
    %v1037 = vpow.pop %v1036
    %v1038 = vmul.f32 %v996, 1.442695
    %v1039 = vpow.pop %v1038
    %v1040 = vmul.f32 %v997, 1.442695
    %v1041 = vpow.pop %v1040
    %v1042 = vmul.f32 %v998, 1.442695
    %v1043 = vpow.pop %v1042
    %v1044 = vmul.f32 %v999, 1.442695
    %v1045 = vpow.pop %v1044
    %v1046 = vmul.f32 %v1000, 1.442695
    %v1047 = vpow.pop %v1046
    %v1048 = vmul.f32 %v1001, 1.442695
    %v1049 = vpow.pop %v1048
    %v1050 = vmul.f32 %v1002, 1.442695
    %v1051 = vpow.pop %v1050
    %v1052 = vmul.f32 %v1003, 1.442695
    %v1053 = vpow.pop %v1052
    %v1054 = vmul.f32 %v1004, 1.442695
    %v1055 = vpow.pop %v1054
    %v1056 = vmul.f32 %v1005, 1.442695
    %v1057 = vpow.pop %v1056
    %v1058 = vmul.f32 %v1006, 1.442695
    %v1059 = vpow.pop %v1058
    %v1060 = vmul.f32 %v1007, 1.442695
    %v1061 = vpow.pop %v1060
    %v1062 = vmul.f32 %v1008, 1.442695
    %v1063 = vpow.pop %v1062
    %v1064 = vmul.f32 %v1009, 1.442695
    %v1065 = vpow.pop %v1064
    %v1066 = vmul.f32 %v1010, 1.442695
    %v1067 = vpow.pop %v1066
    %v1068 = vmul.f32 %v1011, 1.442695
    %v1069 = vpow.pop %v1068
    %v1070 = vmul.f32 %v1012, 1.442695
    %v1071 = vpow.pop %v1070
    %v1072 = vmul.f32 %v1013, 1.442695
    %v1073 = vpow.pop %v1072
    %v1074 = vmul.f32 %v1014, 1.442695
    %v1075 = vpow.pop %v1074
    %v1076 = vmul.f32 %v1015, 1.442695
    %v1077 = vpow.pop %v1076
    %v1078 = vmul.f32 %v1016, 1.442695
    %v1079 = vpow.pop %v1078
    %v1080 = vmul.f32 %v1017, 1.442695
    %v1081 = vpow.pop %v1080
    %1082 = vadd.xlane.f32.xlu0 %v1019
    %v1083 = vpop.xlane.xlu0 %1082
    %1084 = vadd.xlane.f32.xlu0 %v1021
    %v1085 = vpop.xlane.xlu0 %1084
    %1086 = vadd.xlane.f32.xlu0 %v1023
    %v1087 = vpop.xlane.xlu0 %1086
    %1088 = vadd.xlane.f32.xlu0 %v1025
    %v1089 = vpop.xlane.xlu0 %1088
    %1090 = vadd.xlane.f32.xlu0 %v1027
    %v1091 = vpop.xlane.xlu0 %1090
    %1092 = vadd.xlane.f32.xlu0 %v1029
    %v1093 = vpop.xlane.xlu0 %1092
    %1094 = vadd.xlane.f32.xlu0 %v1031
    %v1095 = vpop.xlane.xlu0 %1094
    %1096 = vadd.xlane.f32.xlu0 %v1033
    %v1097 = vpop.xlane.xlu0 %1096
    %1098 = vadd.xlane.f32.xlu0 %v1035
    %v1099 = vpop.xlane.xlu0 %1098
    %1100 = vadd.xlane.f32.xlu0 %v1037
    %v1101 = vpop.xlane.xlu0 %1100
    %1102 = vadd.xlane.f32.xlu0 %v1039
    %v1103 = vpop.xlane.xlu0 %1102
    %1104 = vadd.xlane.f32.xlu0 %v1041
    %v1105 = vpop.xlane.xlu0 %1104
    %1106 = vadd.xlane.f32.xlu0 %v1043
    %v1107 = vpop.xlane.xlu0 %1106
    %1108 = vadd.xlane.f32.xlu0 %v1045
    %v1109 = vpop.xlane.xlu0 %1108
    %1110 = vadd.xlane.f32.xlu0 %v1047
    %v1111 = vpop.xlane.xlu0 %1110
    %1112 = vadd.xlane.f32.xlu0 %v1049
    %v1113 = vpop.xlane.xlu0 %1112
    %1114 = vadd.xlane.f32.xlu0 %v1051
    %v1115 = vpop.xlane.xlu0 %1114
    %1116 = vadd.xlane.f32.xlu0 %v1053
    %v1117 = vpop.xlane.xlu0 %1116
    %1118 = vadd.xlane.f32.xlu0 %v1055
    %v1119 = vpop.xlane.xlu0 %1118
    %1120 = vadd.xlane.f32.xlu0 %v1057
    %v1121 = vpop.xlane.xlu0 %1120
    %1122 = vadd.xlane.f32.xlu0 %v1059
    %v1123 = vpop.xlane.xlu0 %1122
    %1124 = vadd.xlane.f32.xlu0 %v1061
    %v1125 = vpop.xlane.xlu0 %1124
    %1126 = vadd.xlane.f32.xlu0 %v1063
    %v1127 = vpop.xlane.xlu0 %1126
    %1128 = vadd.xlane.f32.xlu0 %v1065
    %v1129 = vpop.xlane.xlu0 %1128
    %1130 = vadd.xlane.f32.xlu0 %v1067
    %v1131 = vpop.xlane.xlu0 %1130
    %1132 = vadd.xlane.f32.xlu0 %v1069
    %v1133 = vpop.xlane.xlu0 %1132
    %1134 = vadd.xlane.f32.xlu0 %v1071
    %v1135 = vpop.xlane.xlu0 %1134
    %1136 = vadd.xlane.f32.xlu0 %v1073
    %v1137 = vpop.xlane.xlu0 %1136
    %1138 = vadd.xlane.f32.xlu0 %v1075
    %v1139 = vpop.xlane.xlu0 %1138
    %1140 = vadd.xlane.f32.xlu0 %v1077
    %v1141 = vpop.xlane.xlu0 %1140
    %1142 = vadd.xlane.f32.xlu0 %v1079
    %v1143 = vpop.xlane.xlu0 %1142
    %1144 = vadd.xlane.f32.xlu0 %v1081
    %v1145 = vpop.xlane.xlu0 %1144
    %v1146 = vrcp.pop %v1083
    %v1147 = vrcp.pop %v1085
    %v1148 = vrcp.pop %v1087
    %v1149 = vrcp.pop %v1089
    %v1150 = vrcp.pop %v1091
    %v1151 = vrcp.pop %v1093
    %v1152 = vrcp.pop %v1095
    %v1153 = vrcp.pop %v1097
    %v1154 = vrcp.pop %v1099
    %v1155 = vrcp.pop %v1101
    %v1156 = vrcp.pop %v1103
    %v1157 = vrcp.pop %v1105
    %v1158 = vrcp.pop %v1107
    %v1159 = vrcp.pop %v1109
    %v1160 = vrcp.pop %v1111
    %v1161 = vrcp.pop %v1113
    %v1162 = vrcp.pop %v1115
    %v1163 = vrcp.pop %v1117
    %v1164 = vrcp.pop %v1119
    %v1165 = vrcp.pop %v1121
    %v1166 = vrcp.pop %v1123
    %v1167 = vrcp.pop %v1125
    %v1168 = vrcp.pop %v1127
    %v1169 = vrcp.pop %v1129
    %v1170 = vrcp.pop %v1131
    %v1171 = vrcp.pop %v1133
    %v1172 = vrcp.pop %v1135
    %v1173 = vrcp.pop %v1137
    %v1174 = vrcp.pop %v1139
    %v1175 = vrcp.pop %v1141
    %v1176 = vrcp.pop %v1143
    %v1177 = vrcp.pop %v1145
    %v1178 = vmul.f32 %v1019, %v1146
    %v1179 = vmul.f32 %v1021, %v1147
    %v1180 = vmul.f32 %v1023, %v1148
    %v1181 = vmul.f32 %v1025, %v1149
    %v1182 = vmul.f32 %v1027, %v1150
    %v1183 = vmul.f32 %v1029, %v1151
    %v1184 = vmul.f32 %v1031, %v1152
    %v1185 = vmul.f32 %v1033, %v1153
    %v1186 = vmul.f32 %v1035, %v1154
    %v1187 = vmul.f32 %v1037, %v1155
    %v1188 = vmul.f32 %v1039, %v1156
    %v1189 = vmul.f32 %v1041, %v1157
    %v1190 = vmul.f32 %v1043, %v1158
    %v1191 = vmul.f32 %v1045, %v1159
    %v1192 = vmul.f32 %v1047, %v1160
    %v1193 = vmul.f32 %v1049, %v1161
    %v1194 = vmul.f32 %v1051, %v1162
    %v1195 = vmul.f32 %v1053, %v1163
    %v1196 = vmul.f32 %v1055, %v1164
    %v1197 = vmul.f32 %v1057, %v1165
    %v1198 = vmul.f32 %v1059, %v1166
    %v1199 = vmul.f32 %v1061, %v1167
    %v1200 = vmul.f32 %v1063, %v1168
    %v1201 = vmul.f32 %v1065, %v1169
    %v1202 = vmul.f32 %v1067, %v1170
    %v1203 = vmul.f32 %v1069, %v1171
    %v1204 = vmul.f32 %v1071, %v1172
    %v1205 = vmul.f32 %v1073, %v1173
    %v1206 = vmul.f32 %v1075, %v1174
    %v1207 = vmul.f32 %v1077, %v1175
    %v1208 = vmul.f32 %v1079, %v1176
    %v1209 = vmul.f32 %v1081, %v1177
    %v1210 = vmul.f32 %v82, %v1178
    %v1211 = vmul.f32 %v83, %v1179
    %v1212 = vmul.f32 %v84, %v1180
    %v1213 = vmul.f32 %v85, %v1181
    %v1214 = vmul.f32 %v86, %v1182
    %v1215 = vmul.f32 %v87, %v1183
    %v1216 = vmul.f32 %v88, %v1184
    %v1217 = vmul.f32 %v89, %v1185
    %v1218 = vmul.f32 %v90, %v1186
    %v1219 = vmul.f32 %v91, %v1187
    %v1220 = vmul.f32 %v92, %v1188
    %v1221 = vmul.f32 %v93, %v1189
    %v1222 = vmul.f32 %v94, %v1190
    %v1223 = vmul.f32 %v95, %v1191
    %v1224 = vmul.f32 %v96, %v1192
    %v1225 = vmul.f32 %v97, %v1193
    %v1226 = vmul.f32 %v98, %v1194
    %v1227 = vmul.f32 %v99, %v1195
    %v1228 = vmul.f32 %v100, %v1196
    %v1229 = vmul.f32 %v101, %v1197
    %v1230 = vmul.f32 %v102, %v1198
    %v1231 = vmul.f32 %v103, %v1199
    %v1232 = vmul.f32 %v104, %v1200
    %v1233 = vmul.f32 %v105, %v1201
    %v1234 = vmul.f32 %v106, %v1202
    %v1235 = vmul.f32 %v107, %v1203
    %v1236 = vmul.f32 %v108, %v1204
    %v1237 = vmul.f32 %v109, %v1205
    %v1238 = vmul.f32 %v110, %v1206
    %v1239 = vmul.f32 %v111, %v1207
    %v1240 = vmul.f32 %v112, %v1208
    %v1241 = vmul.f32 %v113, %v1209
    %1242 = vst [vmem:[#allocation10] sm:$0xff] %v1210
    %1243 = vst [vmem:[#allocation10 + $0x8] sm:$0xff] %v1211
    %1244 = vst [vmem:[#allocation10 + $0x10] sm:$0xff] %v1212
    %1245 = vst [vmem:[#allocation10 + $0x18] sm:$0xff] %v1213
    %1246 = vst [vmem:[#allocation10 + $0x20] sm:$0xff] %v1214
    %1247 = vst [vmem:[#allocation10 + $0x28] sm:$0xff] %v1215
    %1248 = vst [vmem:[#allocation10 + $0x30] sm:$0xff] %v1216
    %1249 = vst [vmem:[#allocation10 + $0x38] sm:$0xff] %v1217
    %1250 = vst [vmem:[#allocation10 + $0x40] sm:$0xff] %v1218
    %1251 = vst [vmem:[#allocation10 + $0x48] sm:$0xff] %v1219
    %1252 = vst [vmem:[#allocation10 + $0x50] sm:$0xff] %v1220
    %1253 = vst [vmem:[#allocation10 + $0x58] sm:$0xff] %v1221
    %1254 = vst [vmem:[#allocation10 + $0x60] sm:$0xff] %v1222
    %1255 = vst [vmem:[#allocation10 + $0x68] sm:$0xff] %v1223
    %1256 = vst [vmem:[#allocation10 + $0x70] sm:$0xff] %v1224
    %1257 = vst [vmem:[#allocation10 + $0x78] sm:$0xff] %v1225
    %1258 = vst [vmem:[#allocation10 + $0x80] sm:$0xff] %v1226
    %1259 = vst [vmem:[#allocation10 + $0x88] sm:$0xff] %v1227
    %1260 = vst [vmem:[#allocation10 + $0x90] sm:$0xff] %v1228
    %1261 = vst [vmem:[#allocation10 + $0x98] sm:$0xff] %v1229
    %1262 = vst [vmem:[#allocation10 + $0xa0] sm:$0xff] %v1230
    %1263 = vst [vmem:[#allocation10 + $0xa8] sm:$0xff] %v1231
    %1264 = vst [vmem:[#allocation10 + $0xb0] sm:$0xff] %v1232
    %1265 = vst [vmem:[#allocation10 + $0xb8] sm:$0xff] %v1233
    %1266 = vst [vmem:[#allocation10 + $0xc0] sm:$0xff] %v1234
    %1267 = vst [vmem:[#allocation10 + $0xc8] sm:$0xff] %v1235
    %1268 = vst [vmem:[#allocation10 + $0xd0] sm:$0xff] %v1236
    %1269 = vst [vmem:[#allocation10 + $0xd8] sm:$0xff] %v1237
    %1270 = vst [vmem:[#allocation10 + $0xe0] sm:$0xff] %v1238
    %1271 = vst [vmem:[#allocation10 + $0xe8] sm:$0xff] %v1239
    %1272 = vst [vmem:[#allocation10 + $0xf0] sm:$0xff] %v1240
    %1273 = vst [vmem:[#allocation10 + $0xf8] sm:$0xff] %v1241
    // Predicated region
    $region46: #{simple_attention.1} parent=1 // pred_check
      _
    $region47: #{simple_attention.1} parent=1 // pred_check_branch
      %1275 = sbr.rel (0) target = $region49
    $region48: #{simple_attention.1} parent=1 // pred_region
      %s1277 = ssub.s32 4096, 4096
      %1278 = vsyncadd [#allocation4], %s1277
      %s1279 = sshll.u32 [#allocation10], 4
      %s1280 = int_to_ptr.vmem [resolvable:$true] %s1279
      %1285 = dma.vmem_to_hbm [thread:$0]  %s1280, 4096, %s7, [#allocation4], 128, 256, 8
    $region49: #{simple_attention.1} parent=1 // pred_fallthru
      _
    // Predicated region
    $region50: #{simple_attention.1} parent=1 // pred_check
      _
    $region51: #{simple_attention.1} parent=1 // pred_check_branch
      %1287 = sbr.rel (0) target = $region53
    $region52: #{simple_attention.1} parent=1 // pred_region
      %1288 = dma.done [#allocation4], 4096
    $region53: #{simple_attention.1} parent=1 // pred_fallthru
      _
    %1289 = vsyncpa [#allocation3], 1
    %1290 = vsyncpa [#allocation6], 1
    %1291 = vsyncpa [#allocation9], 1
    %1292 = vsyncpa [#allocation4], 1

</llo_original>
